<compile_context>
chip_gen: v6e
topology: v6e:2x2x1
jax: 0.10.0
libtpu: 0.0.40
codegen_flags: <defaults>
</compile_context>

<pallas_src>
import math

import jax
import jax.numpy as jnp
from jax import lax
from jax.experimental import pallas as pl
from jax.experimental.pallas import tpu as pltpu


# -----------------------------------------------------------------------------
# Path 1: VMEM-resident embedding table (small / medium vocab).
# Gather TM rows per grid step with a one-hot matmul on the (otherwise idle)
# MXU; output is a dense (TM, D) block.
# -----------------------------------------------------------------------------
def _resident_kernel(scale, vocab):
    def kernel(ids_ref, table_ref, out_ref):
        # ids_ref  : (TM, 1) int32 block of token ids for this step
        # table_ref: (V, D) embedding table, resident in VMEM (fetched once)
        # out_ref  : (TM, D) output block
        ids = ids_ref[...]                                            # (TM, 1)
        iota = lax.broadcasted_iota(jnp.int32, (ids.shape[0], vocab), 1)
        onehot = (ids == iota).astype(table_ref.dtype)                # (TM, V)
        rows = jnp.dot(onehot, table_ref[...],
                       preferred_element_type=jnp.float32)            # (TM, D)
        out_ref[...] = (rows * scale).astype(out_ref.dtype)

    return kernel


def _resident_forward(ids_flat, table, tm, scale, out_dtype):
    np_tok = ids_flat.shape[0]
    V, D = table.shape
    ids_2d = ids_flat.reshape(np_tok, 1)
    return pl.pallas_call(
        _resident_kernel(scale, V),
        out_shape=jax.ShapeDtypeStruct((np_tok, D), out_dtype),
        grid=(np_tok // tm,),
        in_specs=[
            pl.BlockSpec((tm, 1), lambda i: (i, 0)),   # token ids for block i
            pl.BlockSpec((V, D), lambda i: (0, 0)),    # whole table, constant
        ],
        out_specs=pl.BlockSpec((tm, D), lambda i: (i, 0)),
        compiler_params=pltpu.CompilerParams(
            dimension_semantics=("parallel",),          # blocks are independent
            vmem_limit_bytes=32 * 1024 * 1024,
        ),
    )(ids_2d, table)


# -----------------------------------------------------------------------------
# Path 2: table stays in HBM; per step issue TM row-gather DMAs, double-
# buffered across grid steps (prefetch step i+1 while finishing step i).
# -----------------------------------------------------------------------------
def _gather_kernel(scale, tm, vocab):
    def kernel(ids_ref, table_hbm, out_ref, rows, sems):
        # ids_ref  : (Np,) int32 token ids in SMEM (scalar prefetch)
        # table_hbm: (V, D) embedding table, memory_space=pl.ANY (HBM)
        # out_ref  : (TM, D) output block
        # rows     : (2, TM, D) VMEM double buffer for gathered rows
        # sems     : (2, TM) DMA semaphores (one per in-flight row copy)
        i = pl.program_id(0)
        nsteps = pl.num_programs(0)
        slot = i % 2

        def start_fetch(step, dst_slot):
            base = step * tm

            @pl.loop(0, tm)
            def _(t):
                tok = ids_ref[base + t]
                tok = jnp.minimum(jnp.maximum(tok, 0), vocab - 1)  # OOB guard
                pltpu.make_async_copy(
                    table_hbm.at[pl.ds(tok, 1), :],
                    rows.at[dst_slot, pl.ds(t, 1), :],
                    sems.at[dst_slot, t],
                ).start()

        @pl.when(i == 0)
        def _():
            start_fetch(0, 0)           # prime the pipeline

        # Wait for this step's TM row DMAs.
        @pl.loop(0, tm)
        def _(t):
            pltpu.make_async_copy(
                table_hbm.at[pl.ds(0, 1), :],
                rows.at[slot, pl.ds(t, 1), :],
                sems.at[slot, t],
            ).wait()

        # Prefetch next step's rows into the other buffer.
        @pl.when(i + 1 < nsteps)
        def _():
            start_fetch(i + 1, 1 - slot)

        out_ref[...] = (rows[slot].astype(jnp.float32) * scale).astype(out_ref.dtype)

    return kernel


def _gather_forward(ids_flat, table, tm, scale, out_dtype):
    np_tok = ids_flat.shape[0]
    V, D = table.shape
    return pl.pallas_call(
        _gather_kernel(scale, tm, V),
        out_shape=jax.ShapeDtypeStruct((np_tok, D), out_dtype),
        grid_spec=pltpu.PrefetchScalarGridSpec(
            num_scalar_prefetch=1,                       # ids -> SMEM
            grid=(np_tok // tm,),
            in_specs=[pl.BlockSpec(memory_space=pl.ANY)],  # table stays in HBM
            out_specs=pl.BlockSpec((tm, D), lambda i, ids: (i, 0)),
            scratch_shapes=[
                pltpu.VMEM((2, tm, D), table.dtype),     # double-buffered rows
                pltpu.SemaphoreType.DMA((2, tm)),
            ],
        ),
        compiler_params=pltpu.CompilerParams(
            # Cross-step double-buffer state machine -> sequential grid.
            dimension_semantics=("arbitrary",),
            vmem_limit_bytes=32 * 1024 * 1024,
        ),
    )(ids_flat, table)


# -----------------------------------------------------------------------------
# Wrapper: EmbeddingLayer.forward (eval mode)
# -----------------------------------------------------------------------------
def embedding_layer_forward(token_ids, embed_table, *, block_tokens=128,
                            vmem_resident_max_bytes=12 * 1024 * 1024,
                            force_path=None):
    """token_ids: (B, S) int; embed_table: (V, D) float -> (B, S, D) float32.

    Computes dropout_eval(embed_table[token_ids]) * sqrt(D) with the scale
    (and any dtype upcast, e.g. a bf16 table) fused in-kernel.
    """
    B, S = token_ids.shape
    V, D = embed_table.shape
    N = B * S
    scale = math.sqrt(float(D))
    out_dtype = jnp.float32

    # Tokens per grid step: amortize per-step overhead, keep blocks
    # sublane-dense (TM % 8 == 0; multiple of 128 when multi-block).
    if N <= block_tokens:
        tm = max(8, ((N + 7) // 8) * 8)
    else:
        tm = max(128, (block_tokens // 128) * 128)
    np_tok = ((N + tm - 1) // tm) * tm

    ids_flat = token_ids.reshape(N).astype(jnp.int32)
    if np_tok != N:
        ids_flat = jnp.concatenate(
            [ids_flat, jnp.zeros((np_tok - N,), jnp.int32)])

    table_bytes = V * D * embed_table.dtype.itemsize
    if force_path is None:
        path = "resident" if table_bytes <= vmem_resident_max_bytes else "gather"
    else:
        path = force_path

    if path == "resident":
        out_flat = _resident_forward(ids_flat, embed_table, tm, scale, out_dtype)
    elif path == "gather":
        out_flat = _gather_forward(ids_flat, embed_table, tm, scale, out_dtype)
    else:
        raise ValueError(f"unknown path: {path}")

    if np_tok != N:
        out_flat = out_flat[:N]
    # TODO(synk): for D < 128, repacking the output view to 128-wide rows
    #             (128/D tokens per row) would make the stores fully lane-dense.
    return out_flat.reshape(B, S, D)


if __name__ == "__main__":
    # Module hyper-parameters (small, consistent with the forward pass).
    vocab_size = 256
    d_model = 128
    dropout_perc = 0.1  # inactive in eval mode (identity)
    B, S = 2, 8

    key = jax.random.PRNGKey(0)
    k_w, k_x = jax.random.split(key)

    # Deterministic synthetic parameters: nn.Embedding weight ~ N(0, 1).
    embed_table = jax.random.normal(k_w, (vocab_size, d_model), dtype=jnp.float32)
    token_ids = jax.random.randint(k_x, (B, S), 0, vocab_size, dtype=jnp.int32)

    # Reference (plain JAX): embedding lookup * sqrt(d_model), eval dropout.
    ref = embed_table[token_ids] * math.sqrt(float(d_model))

    # Resident-table path (small vocab -> table lives in VMEM).
    out_res = embedding_layer_forward(token_ids, embed_table, force_path="resident")
    out_res = jax.block_until_ready(out_res)
    assert out_res.shape == (B, S, d_model)
    # Loose-ish tolerance: the one-hot gather goes through the MXU, whose f32
    # input rounding depends on the selected matmul precision.
    assert jnp.allclose(out_res, ref, atol=1e-2, rtol=1e-2)

    # HBM DMA-gather path (general/large-vocab path), exercised at small shape.
    out_gat = embedding_layer_forward(token_ids, embed_table, force_path="gather")
    out_gat = jax.block_until_ready(out_gat)
    assert out_gat.shape == (B, S, d_model)
    assert jnp.allclose(out_gat, ref, atol=1e-5, rtol=1e-5)

    print("KERNEL_OK")
</pallas_src>

<mosaic_0001>
module attributes {stable_mosaic.version = 11 : i64} {
  func.func @kernel(%arg0: i32, %arg1: memref<16x1xi32, #tpu.memory_space<vmem>>, %arg2: memref<256x128xf32, #tpu.memory_space<vmem>>, %arg3: memref<16x128xf32, #tpu.memory_space<vmem>>) attributes {dimension_semantics = [#tpu.dimension_semantics<parallel>], iteration_bounds = array<i64: 1>, scalar_prefetch = 0 : i64, scratch_operands = 0 : i64, tpu.core_type = #tpu.core_type<tc>, window_params = [{transform_indices = @transform_0, window_bounds = array<i64: 16, 1>}, {pipeline_mode = #tpu.pipeline_mode<synchronous>, transform_indices = @transform_1, window_bounds = array<i64: 256, 128>}, {transform_indices = @transform_2, window_bounds = array<i64: 16, 128>}]} {
    %c0 = arith.constant 0 : index
    %c0_0 = arith.constant 0 : index
    %0 = vector.load %arg1[%c0, %c0_0] : memref<16x1xi32, #tpu.memory_space<vmem>>, vector<16x1xi32>
    %1 = tpu.iota {dimensions = array<i32: 1>} : vector<16x256xi32>
    %2 = vector.broadcast %0 : vector<16x1xi32> to vector<16x256xi32>
    %3 = arith.cmpi eq, %2, %1 : vector<16x256xi32>
    %4 = arith.extui %3 : vector<16x256xi1> to vector<16x256xi32>
    %5 = arith.sitofp %4 : vector<16x256xi32> to vector<16x256xf32>
    %c0_1 = arith.constant 0 : index
    %c0_2 = arith.constant 0 : index
    %6 = vector.load %arg2[%c0_1, %c0_2] : memref<256x128xf32, #tpu.memory_space<vmem>>, vector<256x128xf32>
    %cst = arith.constant dense<0.000000e+00> : vector<16x128xf32>
    %7 = tpu.matmul %5, %6, %cst {dimension_numbers = #tpu.dot_dimension_numbers<[1], [0], [0], [1], [0, 0, 1, 1], [], []>} : vector<16x256xf32>, vector<256x128xf32>, vector<16x128xf32> -> vector<16x128xf32>
    %cst_3 = arith.constant 11.3137083 : f32
    %8 = vector.broadcast %cst_3 : f32 to vector<16x128xf32>
    %9 = arith.mulf %7, %8 : vector<16x128xf32>
    %c0_4 = arith.constant 0 : index
    %c0_5 = arith.constant 0 : index
    %10 = vector.load %arg3[%c0_4, %c0_5] : memref<16x128xf32, #tpu.memory_space<vmem>>, vector<16x128xf32>
    tpu.vector_store %arg3[%c0_4, %c0_5], %9 {strides = array<i32>} : memref<16x128xf32, #tpu.memory_space<vmem>>, vector<16x128xf32>,
    return
  }
  func.func @transform_0(%arg0: i32) -> (i32, i32) {
    %c0_i32 = arith.constant 0 : i32
    %c0_i32_0 = arith.constant 0 : i32
    return %arg0, %c0_i32 : i32, i32
  }
  func.func @transform_1(%arg0: i32) -> (i32, i32) {
    %c0_i32 = arith.constant 0 : i32
    %c0_i32_0 = arith.constant 0 : i32
    %c0_i32_1 = arith.constant 0 : i32
    return %c0_i32, %c0_i32_0 : i32, i32
  }
  func.func @transform_2(%arg0: i32) -> (i32, i32) {
    %c0_i32 = arith.constant 0 : i32
    %c0_i32_0 = arith.constant 0 : i32
    return %arg0, %c0_i32 : i32, i32
  }
}

</mosaic_0001>

<llo_original>
// kernel: tpu_custom_call.1
$region0: #{tpu_custom_call.1}
  #allocation0 [shape = 'u32[]', space=smem, size = 0x4, offset = 0x4, fixed_abs, tag = 'smem constant byte address 0x4 - core index']
  #allocation1 [shape = 'u32[144,128]{1,0:T(1,128)}', space=vmem, size = 0x12000, scoped, tag = 'internal scratch']
  %s0 = inlined_call_operand.vmem [shape: s32[16,1], index: 0, kind: input, shape index: {}]
  %s1 = inlined_call_operand.hbm [shape: f32[256,128], index: 1, kind: input, shape index: {}]
  %s2 = inlined_call_operand.hbm [shape: f32[16,128], index: 2, kind: output, shape index: {}]
  %s3 = sld [smem:[#allocation0]]
  $region22: #{tpu_custom_call.1} parent=0
    _
  %s5 = ssub.s32 1, %s3
  %s6 = scalar_select 0, %s5, %s3
  $region1: #{tpu_custom_call.1} parent=0
    #allocation2 [shape = 'u8[131072]{0}', space=vmem, size = 0x20000, scoped, tag = 'input window, operand 1, single buffered']
    #allocation3 [shape = 's32[1]{0}', space=sflag, size = 0x4, scoped, tag = 'scoped memory for tpu_custom_call.1']
    #allocation4 [shape = 's32[1]{0}', space=sflag, size = 0x4, scoped, tag = 'scoped memory for tpu_custom_call.1']
    #allocation5 [shape = 'u8[8192]{0}', space=vmem, size = 0x2000, scoped, tag = 'output window, operand 0, single buffered']
    %7 = vsyncpa [#allocation3], 0
    %8 = vsyncpa [#allocation4], 0
    // Predicated region
    $region2: #{tpu_custom_call.1} parent=1 // pred_check
      _
    $region3: #{tpu_custom_call.1} parent=1 // pred_check_branch
      %10 = sbr.rel (0) target = $region5
    $region4: #{tpu_custom_call.1} parent=1 // pred_region
      _
    $region5: #{tpu_custom_call.1} parent=1 // pred_fallthru
      _
    // Predicated region
    $region6: #{tpu_custom_call.1} parent=1 // pred_check
      _
    $region7: #{tpu_custom_call.1} parent=1 // pred_check_branch
      %12 = sbr.rel (0) target = $region9
    $region8: #{tpu_custom_call.1} parent=1 // pred_region
      %s14 = ssub.s32 4096, 4096
      %15 = vsyncadd [#allocation3], %s14
      %s16 = sshll.u32 [#allocation2], 4
      %s17 = int_to_ptr.vmem [resolvable:$true] %s16
      %22 = dma.hbm_to_vmem [thread:$0]  %s1, 4096, %s17, [#allocation3], 128, 128, 8
    $region9: #{tpu_custom_call.1} parent=1 // pred_fallthru
      _
    // Predicated region
    $region10: #{tpu_custom_call.1} parent=1 // pred_check
      _
    $region11: #{tpu_custom_call.1} parent=1 // pred_check_branch
      %24 = sbr.rel (0) target = $region13
    $region12: #{tpu_custom_call.1} parent=1 // pred_region
      %25 = dma.done [#allocation3], 4096
    $region13: #{tpu_custom_call.1} parent=1 // pred_fallthru
      _
    %v26 = vld [vmem:[%s0] sm:$0xff]
    %v27 = vld [vmem:[%s0 + $0x8] sm:$0xff]
    %v28 = vlaneseq
    %v29 = vand.u32 %v28, 127
    %v30 = vadd.s32 %v29, 128
    %31 = vset.pattern.permute.xlu0 0
    %32 = vperm.xlu0 %31, %v26
    %v33 = vpop.permute.xlu0 %32
    %34 = vset.pattern.permute.xlu0 0
    %35 = vperm.xlu0 %34, %v27
    %v36 = vpop.permute.xlu0 %35
    %vm37 = vcmp.eq.s32.totalorder %v33, %v29
    %vm38 = vcmp.eq.s32.totalorder %v33, %v30
    %vm39 = vcmp.eq.s32.totalorder %v36, %v29
    %vm40 = vcmp.eq.s32.totalorder %v36, %v30
    %v41 = vsel %vm37, 1, 0
    %v42 = vsel %vm38, 1, 0
    %v43 = vsel %vm39, 1, 0
    %v44 = vsel %vm40, 1, 0
    %v45 = vcvt.s32.f32 %v41
    %v46 = vcvt.s32.f32 %v42
    %v47 = vcvt.s32.f32 %v43
    %v48 = vcvt.s32.f32 %v44
    %v49 = vld [vmem:[#allocation2] sm:$0xff]
    %v50 = vld [vmem:[#allocation2 + $0x8] sm:$0xff]
    %v51 = vld [vmem:[#allocation2 + $0x10] sm:$0xff]
    %v52 = vld [vmem:[#allocation2 + $0x18] sm:$0xff]
    %v53 = vld [vmem:[#allocation2 + $0x20] sm:$0xff]
    %v54 = vld [vmem:[#allocation2 + $0x28] sm:$0xff]
    %v55 = vld [vmem:[#allocation2 + $0x30] sm:$0xff]
    %v56 = vld [vmem:[#allocation2 + $0x38] sm:$0xff]
    %v57 = vld [vmem:[#allocation2 + $0x40] sm:$0xff]
    %v58 = vld [vmem:[#allocation2 + $0x48] sm:$0xff]
    %v59 = vld [vmem:[#allocation2 + $0x50] sm:$0xff]
    %v60 = vld [vmem:[#allocation2 + $0x58] sm:$0xff]
    %v61 = vld [vmem:[#allocation2 + $0x60] sm:$0xff]
    %v62 = vld [vmem:[#allocation2 + $0x68] sm:$0xff]
    %v63 = vld [vmem:[#allocation2 + $0x70] sm:$0xff]
    %v64 = vld [vmem:[#allocation2 + $0x78] sm:$0xff]
    %v65 = vld [vmem:[#allocation2 + $0x80] sm:$0xff]
    %v66 = vld [vmem:[#allocation2 + $0x88] sm:$0xff]
    %v67 = vld [vmem:[#allocation2 + $0x90] sm:$0xff]
    %v68 = vld [vmem:[#allocation2 + $0x98] sm:$0xff]
    %v69 = vld [vmem:[#allocation2 + $0xa0] sm:$0xff]
    %v70 = vld [vmem:[#allocation2 + $0xa8] sm:$0xff]
    %v71 = vld [vmem:[#allocation2 + $0xb0] sm:$0xff]
    %v72 = vld [vmem:[#allocation2 + $0xb8] sm:$0xff]
    %v73 = vld [vmem:[#allocation2 + $0xc0] sm:$0xff]
    %v74 = vld [vmem:[#allocation2 + $0xc8] sm:$0xff]
    %v75 = vld [vmem:[#allocation2 + $0xd0] sm:$0xff]
    %v76 = vld [vmem:[#allocation2 + $0xd8] sm:$0xff]
    %v77 = vld [vmem:[#allocation2 + $0xe0] sm:$0xff]
    %v78 = vld [vmem:[#allocation2 + $0xe8] sm:$0xff]
    %v79 = vld [vmem:[#allocation2 + $0xf0] sm:$0xff]
    %v80 = vld [vmem:[#allocation2 + $0xf8] sm:$0xff]
    %81 = vmatprep.subr.mxu0 0.0
    %82 = vmatpush1.msra.mxu0 %v64
    %83 = vmatprep.subr.mxu0 0.0
    %84 = vmatpush1.msra.mxu0 %v63
    %85 = vmatprep.subr.mxu0 0.0
    %86 = vmatpush1.msra.mxu0 %v62
    %87 = vmatprep.subr.mxu0 0.0
    %88 = vmatpush1.msra.mxu0 %v61
    %89 = vmatprep.subr.mxu0 0.0
    %90 = vmatpush1.msra.mxu0 %v60
    %91 = vmatprep.subr.mxu0 0.0
    %92 = vmatpush1.msra.mxu0 %v59
    %93 = vmatprep.subr.mxu0 0.0
    %94 = vmatpush1.msra.mxu0 %v58
    %95 = vmatprep.subr.mxu0 0.0
    %96 = vmatpush1.msra.mxu0 %v57
    %97 = vmatprep.subr.mxu0 0.0
    %98 = vmatpush1.msra.mxu0 %v56
    %99 = vmatprep.subr.mxu0 0.0
    %100 = vmatpush1.msra.mxu0 %v55
    %101 = vmatprep.subr.mxu0 0.0
    %102 = vmatpush1.msra.mxu0 %v54
    %103 = vmatprep.subr.mxu0 0.0
    %104 = vmatpush1.msra.mxu0 %v53
    %105 = vmatprep.subr.mxu0 0.0
    %106 = vmatpush1.msra.mxu0 %v52
    %107 = vmatprep.subr.mxu0 0.0
    %108 = vmatpush1.msra.mxu0 %v51
    %109 = vmatprep.subr.mxu0 0.0
    %110 = vmatpush1.msra.mxu0 %v50
    %111 = vmatprep.subr.mxu0 0.0
    %112 = vmatpush1.msra.mxu0 %v49
    %113 = vmatprep.subr.mxu0 0.0
    %114 = vmatpush2.msra.mxu0 %v80
    %115 = vmatprep.subr.mxu0 0.0
    %116 = vmatpush2.msra.mxu0 %v79
    %117 = vmatprep.subr.mxu0 0.0
    %118 = vmatpush2.msra.mxu0 %v78
    %119 = vmatprep.subr.mxu0 0.0
    %120 = vmatpush2.msra.mxu0 %v77
    %121 = vmatprep.subr.mxu0 0.0
    %122 = vmatpush2.msra.mxu0 %v76
    %123 = vmatprep.subr.mxu0 0.0
    %124 = vmatpush2.msra.mxu0 %v75
    %125 = vmatprep.subr.mxu0 0.0
    %126 = vmatpush2.msra.mxu0 %v74
    %127 = vmatprep.subr.mxu0 0.0
    %128 = vmatpush2.msra.mxu0 %v73
    %129 = vmatprep.subr.mxu0 0.0
    %130 = vmatpush2.msra.mxu0 %v72
    %131 = vmatprep.subr.mxu0 0.0
    %132 = vmatpush2.msra.mxu0 %v71
    %133 = vmatprep.subr.mxu0 0.0
    %134 = vmatpush2.msra.mxu0 %v70
    %135 = vmatprep.subr.mxu0 0.0
    %136 = vmatpush2.msra.mxu0 %v69
    %137 = vmatprep.subr.mxu0 0.0
    %138 = vmatpush2.msra.mxu0 %v68
    %139 = vmatprep.subr.mxu0 0.0
    %140 = vmatpush2.msra.mxu0 %v67
    %141 = vmatprep.subr.mxu0 0.0
    %142 = vmatpush2.msra.mxu0 %v66
    %143 = vmatprep.subr.mxu0 0.0
    %144 = vmatpush2.msra.mxu0 %v65
    %145 = vmatprep.mubr.f32.mxu0 %v46
    %146 = vmatmul.mubr.f32.gmra.mxu0 %v45
    %v147 = vpop.f32.mrf.mxu0
    %v148 = vadd.f32 0.0, %v147
    %v149 = vpop.f32.mrf.mxu0
    %150 = vmatprep.mubr.f32.mxu0 %v48
    %151 = vmatmul.mubr.f32.gmra.mxu0 %v47
    %v152 = vpop.f32.mrf.mxu0
    %v153 = vadd.f32 0.0, %v152
    %v154 = vpop.f32.mrf.mxu0
    %155 = vdwg.mxu0
    %v156 = vmul.f32 %v148, 11.313708
    %v157 = vmul.f32 %v153, 11.313708
    %158 = vst [vmem:[#allocation5] sm:$0xff] %v156
    %159 = vst [vmem:[#allocation5 + $0x8] sm:$0xff] %v157
    // Predicated region
    $region14: #{tpu_custom_call.1} parent=1 // pred_check
      _
    $region15: #{tpu_custom_call.1} parent=1 // pred_check_branch
      %161 = sbr.rel (0) target = $region17
    $region16: #{tpu_custom_call.1} parent=1 // pred_region
      %s163 = ssub.s32 256, 256
      %164 = vsyncadd [#allocation4], %s163
      %s165 = sshll.u32 [#allocation5], 4
      %s166 = int_to_ptr.vmem [resolvable:$true] %s165
      %171 = dma.vmem_to_hbm [thread:$0]  %s166, 256, %s2, [#allocation4], 128, 128, 8
    $region17: #{tpu_custom_call.1} parent=1 // pred_fallthru
      _
    // Predicated region
    $region18: #{tpu_custom_call.1} parent=1 // pred_check
      _
    $region19: #{tpu_custom_call.1} parent=1 // pred_check_branch
      %173 = sbr.rel (0) target = $region21
    $region20: #{tpu_custom_call.1} parent=1 // pred_region
      %174 = dma.done [#allocation4], 256
    $region21: #{tpu_custom_call.1} parent=1 // pred_fallthru
      _
    %175 = vsyncpa [#allocation3], 1
    %176 = vsyncpa [#allocation4], 1

</llo_original>
